<compile_context>
chip_gen: v5e
topology: v5e:2x2
jax: 0.10.0
libtpu: 0.0.40
codegen_flags: <defaults>
</compile_context>

<pallas_src>
import jax
import jax.numpy as jnp
from jax import lax
from jax.experimental import pallas as pl
from jax.experimental.pallas import tpu as pltpu


def _round_up(a, b):
    return ((a + b - 1) // b) * b


def _vmem_limit_bytes():
    """~75% of physical VMEM; conservative fallback works on every generation."""
    try:
        info = pltpu.get_tpu_info()
        cap = getattr(info, "vmem_capacity_bytes", None)
        if cap:
            return (int(cap) * 3) // 4
    except Exception:
        pass
    return 48 * 1024 * 1024  # safe even on v7x (64 MiB physical)


def _make_avg_pool_kernel(use_scratch):
    """Kernel for one (segment-block, D-block, row-tile) grid step.

    first_tile_ref / last_tile_ref : SMEM int32 [num_g_blocks] (scalar prefetch)
    starts_ref / ends_ref          : VMEM int32 [G_blk, 1]  segment boundaries
    x_ref                          : VMEM       [N_tile, D_blk] row tile of x
    o_ref                          : VMEM       [G_blk, D_blk] segment means
    scratch (optional)             : VMEM f32   [G_blk, D_blk] accumulator
    """

    def kernel(first_tile_ref, last_tile_ref, starts_ref, ends_ref,
               x_ref, o_ref, *scratch):
        acc_ref = scratch[0] if use_scratch else o_ref
        g = pl.program_id(0)
        k = pl.program_id(2)
        n_tile = x_ref.shape[0]

        @pl.when(k == 0)
        def _init():
            acc_ref[...] = jnp.zeros_like(acc_ref)

        first_t = first_tile_ref[g]
        last_t = last_tile_ref[g]

        # Only row tiles that can overlap this segment block do any work; the
        # remaining k steps reuse the clamped tile index (no DMA) and skip the
        # MXU push entirely.
        @pl.when(first_t + k <= last_t)
        def _accumulate():
            row0 = (first_t + k) * n_tile          # global row of tile col 0
            col_ids = row0 + lax.broadcasted_iota(jnp.int32, (1, n_tile), 1)
            starts = starts_ref[...]               # [G_blk, 1]
            ends = ends_ref[...]                   # [G_blk, 1]
            sel = ((col_ids >= starts) & (col_ids < ends)).astype(x_ref.dtype)
            acc_ref[...] += jnp.dot(sel, x_ref[...],
                                    preferred_element_type=jnp.float32)

        @pl.when(k == pl.num_programs(2) - 1)
        def _finalize():
            counts = (ends_ref[...] - starts_ref[...]).astype(jnp.float32)
            # 0/0 -> NaN for empty segments (matches torch.mean of empty slice).
            inv = pl.reciprocal(counts, approx=False)
            o_ref[...] = (acc_ref[...] * inv).astype(o_ref.dtype)

    return kernel


def avg_pooling(x, ptr, *, seg_block=256, d_block=512, n_tile_max=None):
    """x: [N, D] float array, ptr: [G+1] int offsets -> [G, D] segment means."""
    if not jnp.issubdtype(x.dtype, jnp.floating):
        x = x.astype(jnp.float32)
    n, d = x.shape
    num_segments = int(ptr.shape[0]) - 1
    ptr = ptr.astype(jnp.int32)
    starts = ptr[:-1]
    ends = ptr[1:]

    # ---- tile sizes --------------------------------------------------------
    assert seg_block % 8 == 0 and d_block % 128 == 0
    g_blk = min(seg_block, _round_up(max(num_segments, 1), 8))
    g_pad = _round_up(max(num_segments, 1), g_blk)
    d_blk = min(d_block, _round_up(d, 128))
    d_pad = _round_up(_round_up(d, 128), d_blk)
    if n_tile_max is None:
        # Narrow D block -> big row tiles (avoid per-step-overhead bound);
        # wide D block -> keep the x tile modest for VMEM (v7x: 64 MiB).
        n_tile_max = 2048 if d_blk <= 512 else 512
    n_tile = min(n_tile_max, _round_up(max(n, 1), 8))
    n_pad = _round_up(max(n, 1), n_tile)

    num_g_blocks = g_pad // g_blk
    num_d_blocks = d_pad // d_blk
    num_row_tiles = n_pad // n_tile

    # ---- padded operands ---------------------------------------------------
    # Padded rows are never selected (end <= N); padded segments are empty and
    # sliced off; padded feature columns are sliced off.
    x_p = jnp.pad(x, ((0, n_pad - n), (0, d_pad - d)))
    starts_p = jnp.pad(starts, (0, g_pad - num_segments)).reshape(g_pad, 1)
    ends_p = jnp.pad(ends, (0, g_pad - num_segments)).reshape(g_pad, 1)

    # ---- per-segment-block row-tile range (scalar prefetch -> SMEM) ---------
    gb = jnp.arange(num_g_blocks, dtype=jnp.int32)
    first_seg = gb * g_blk                                   # first real segment
    last_seg_excl = jnp.minimum((gb + 1) * g_blk, num_segments)
    blk_row_start = ptr[first_seg]
    blk_row_end = ptr[last_seg_excl]
    blk_first_tile = jnp.minimum(blk_row_start // n_tile,
                                 num_row_tiles - 1).astype(jnp.int32)
    blk_last_tile = jnp.maximum(
        blk_first_tile,
        (jnp.maximum(blk_row_end, 1) - 1) // n_tile).astype(jnp.int32)

    use_scratch = x.dtype != jnp.float32
    scratch_shapes = ((pltpu.VMEM((g_blk, d_blk), jnp.float32),)
                      if use_scratch else ())
    kernel = _make_avg_pool_kernel(use_scratch)

    def x_map(g, dd, k, ft, lt):
        # Data-dependent row tiling: start at this block's first row tile and
        # clamp at its last, so out-of-range k steps repeat the previous tile
        # index (no redundant DMA) and the kernel skips them.
        return (jnp.minimum(ft[g] + k, lt[g]), dd)

    grid_spec = pltpu.PrefetchScalarGridSpec(
        num_scalar_prefetch=2,
        grid=(num_g_blocks, num_d_blocks, num_row_tiles),
        in_specs=[
            pl.BlockSpec((g_blk, 1), lambda g, dd, k, ft, lt: (g, 0)),   # starts
            pl.BlockSpec((g_blk, 1), lambda g, dd, k, ft, lt: (g, 0)),   # ends
            pl.BlockSpec((n_tile, d_blk), x_map),                        # x tile
        ],
        out_specs=pl.BlockSpec((g_blk, d_blk),
                               lambda g, dd, k, ft, lt: (g, dd)),
        scratch_shapes=scratch_shapes,
    )

    out = pl.pallas_call(
        kernel,
        out_shape=jax.ShapeDtypeStruct((g_pad, d_pad), x.dtype),
        grid_spec=grid_spec,
        compiler_params=pltpu.CompilerParams(
            dimension_semantics=("parallel", "parallel", "arbitrary"),
            vmem_limit_bytes=_vmem_limit_bytes(),
        ),
    )(blk_first_tile, blk_last_tile, starts_p, ends_p, x_p)

    return out[:num_segments, :d]


if __name__ == "__main__":
    key = jax.random.PRNGKey(0)

    # Small example consistent with the module: 16 rows, 32 features,
    # 4 segments of (uneven) sizes 3, 4, 5, 4.
    N, D = 16, 32
    x = jax.random.normal(key, (N, D), dtype=jnp.float32)
    ptr = jnp.array([0, 3, 7, 12, 16], dtype=jnp.int32)

    out = jax.block_until_ready(avg_pooling(x, ptr))
    ref = jnp.stack([jnp.mean(x[int(ptr[i]):int(ptr[i + 1])], axis=0)
                     for i in range(ptr.shape[0] - 1)], axis=0)
    assert out.shape == (ptr.shape[0] - 1, D)
    assert jnp.allclose(out, ref, atol=1e-5, rtol=1e-5)

    # Second check: multiple segment blocks + multiple row tiles, exercising
    # the data-dependent index_map, the clamped-tile reuse and the skip guard.
    sizes = [5, 3, 7, 1, 9, 4, 6, 2, 8, 5, 10, 4]          # 12 segments, 64 rows
    offs = [0]
    for s in sizes:
        offs.append(offs[-1] + s)
    ptr2 = jnp.array(offs, dtype=jnp.int32)
    x2 = jax.random.normal(jax.random.PRNGKey(0), (offs[-1], 32),
                           dtype=jnp.float32)
    out2 = jax.block_until_ready(
        avg_pooling(x2, ptr2, seg_block=8, d_block=128, n_tile_max=16))
    ref2 = jnp.stack([jnp.mean(x2[offs[i]:offs[i + 1]], axis=0)
                      for i in range(len(sizes))], axis=0)
    assert jnp.allclose(out2, ref2, atol=1e-5, rtol=1e-5)

    # Third check: bfloat16 input exercises the f32 scratch-accumulator path.
    x3 = x2.astype(jnp.bfloat16)
    out3 = jax.block_until_ready(
        avg_pooling(x3, ptr2, seg_block=8, d_block=128, n_tile_max=16))
    ref3 = jnp.stack([jnp.mean(x3[offs[i]:offs[i + 1]].astype(jnp.float32),
                               axis=0)
                      for i in range(len(sizes))], axis=0)
    assert out3.dtype == jnp.bfloat16
    assert jnp.allclose(out3.astype(jnp.float32), ref3, atol=5e-2, rtol=5e-2)

    print("KERNEL_OK")
</pallas_src>

<mosaic_0001>
module attributes {stable_mosaic.version = 11 : i64} {
  func.func @kernel(%arg0: i32, %arg1: i32, %arg2: i32, %arg3: memref<1xi32, #tpu.memory_space<smem>>, %arg4: memref<1xi32, #tpu.memory_space<smem>>, %arg5: memref<8x1xi32, #tpu.memory_space<vmem>>, %arg6: memref<8x1xi32, #tpu.memory_space<vmem>>, %arg7: memref<16x128xf32, #tpu.memory_space<vmem>>, %arg8: memref<8x128xf32, #tpu.memory_space<vmem>>) attributes {dimension_semantics = [#tpu.dimension_semantics<parallel>, #tpu.dimension_semantics<parallel>, #tpu.dimension_semantics<arbitrary>], iteration_bounds = array<i64: 1, 1, 1>, scalar_prefetch = 2 : i64, scratch_operands = 0 : i64, tpu.core_type = #tpu.core_type<tc>, window_params = [{transform_indices = @transform_0, window_bounds = array<i64: 8, 1>}, {transform_indices = @transform_1, window_bounds = array<i64: 8, 1>}, {transform_indices = @transform_2, window_bounds = array<i64: 16, 128>}, {transform_indices = @transform_3, window_bounds = array<i64: 8, 128>}]} {
    %c0_i32 = arith.constant 0 : i32
    %0 = arith.cmpi eq, %arg2, %c0_i32 : i32
    %1 = arith.extui %0 : i1 to i32
    %c0_i32_0 = arith.constant 0 : i32
    %2 = arith.cmpi ne, %1, %c0_i32_0 : i32
    scf.if %2 {
      %cst = arith.constant 0.000000e+00 : f32
      %14 = vector.broadcast %cst : f32 to vector<8x128xf32>
      %c0 = arith.constant 0 : index
      %c0_4 = arith.constant 0 : index
      %15 = vector.load %arg8[%c0, %c0_4] : memref<8x128xf32, #tpu.memory_space<vmem>>, vector<8x128xf32>
      tpu.vector_store %arg8[%c0, %c0_4], %14 {strides = array<i32>} : memref<8x128xf32, #tpu.memory_space<vmem>>, vector<8x128xf32>,
    } else {
    }
    %3 = arith.index_cast %arg0 : i32 to index
    %4 = memref.load %arg3[%3] : memref<1xi32, #tpu.memory_space<smem>>
    %5 = arith.index_cast %arg0 : i32 to index
    %6 = memref.load %arg4[%5] : memref<1xi32, #tpu.memory_space<smem>>
    %7 = arith.addi %4, %arg2 : i32
    %8 = arith.cmpi sle, %7, %6 : i32
    %9 = arith.extui %8 : i1 to i32
    %c0_i32_1 = arith.constant 0 : i32
    %10 = arith.cmpi ne, %9, %c0_i32_1 : i32
    scf.if %10 {
      %14 = arith.addi %4, %arg2 : i32
      %c16_i32 = arith.constant 16 : i32
      %15 = arith.muli %14, %c16_i32 : i32
      %16 = tpu.iota {dimensions = array<i32: 1>} : vector<1x16xi32>
      %17 = vector.broadcast %15 : i32 to vector<1x16xi32>
      %18 = arith.addi %17, %16 : vector<1x16xi32>
      %c0 = arith.constant 0 : index
      %c0_4 = arith.constant 0 : index
      %19 = vector.load %arg5[%c0, %c0_4] : memref<8x1xi32, #tpu.memory_space<vmem>>, vector<8x1xi32>
      %c0_5 = arith.constant 0 : index
      %c0_6 = arith.constant 0 : index
      %20 = vector.load %arg6[%c0_5, %c0_6] : memref<8x1xi32, #tpu.memory_space<vmem>>, vector<8x1xi32>
      %21 = vector.broadcast %18 : vector<1x16xi32> to vector<8x16xi32>
      %22 = vector.broadcast %19 : vector<8x1xi32> to vector<8x16xi32>
      %23 = arith.cmpi sge, %21, %22 : vector<8x16xi32>
      %24 = vector.broadcast %18 : vector<1x16xi32> to vector<8x16xi32>
      %25 = vector.broadcast %20 : vector<8x1xi32> to vector<8x16xi32>
      %26 = arith.cmpi slt, %24, %25 : vector<8x16xi32>
      %27 = arith.andi %23, %26 : vector<8x16xi1>
      %28 = arith.extui %27 : vector<8x16xi1> to vector<8x16xi32>
      %29 = arith.sitofp %28 : vector<8x16xi32> to vector<8x16xf32>
      %c0_7 = arith.constant 0 : index
      %c0_8 = arith.constant 0 : index
      %30 = vector.load %arg8[%c0_7, %c0_8] : memref<8x128xf32, #tpu.memory_space<vmem>>, vector<8x128xf32>
      %c0_9 = arith.constant 0 : index
      %c0_10 = arith.constant 0 : index
      %31 = vector.load %arg7[%c0_9, %c0_10] : memref<16x128xf32, #tpu.memory_space<vmem>>, vector<16x128xf32>
      %cst = arith.constant dense<0.000000e+00> : vector<8x128xf32>
      %32 = tpu.matmul %29, %31, %cst {dimension_numbers = #tpu.dot_dimension_numbers<[1], [0], [0], [1], [0, 0, 1, 1], [], []>} : vector<8x16xf32>, vector<16x128xf32>, vector<8x128xf32> -> vector<8x128xf32>
      %33 = arith.addf %30, %32 : vector<8x128xf32>
      %c0_11 = arith.constant 0 : index
      %c0_12 = arith.constant 0 : index
      %34 = vector.load %arg8[%c0_11, %c0_12] : memref<8x128xf32, #tpu.memory_space<vmem>>, vector<8x128xf32>
      tpu.vector_store %arg8[%c0_11, %c0_12], %33 {strides = array<i32>} : memref<8x128xf32, #tpu.memory_space<vmem>>, vector<8x128xf32>,
    } else {
    }
    %c0_i32_2 = arith.constant 0 : i32
    %11 = arith.cmpi eq, %arg2, %c0_i32_2 : i32
    %12 = arith.extui %11 : i1 to i32
    %c0_i32_3 = arith.constant 0 : i32
    %13 = arith.cmpi ne, %12, %c0_i32_3 : i32
    scf.if %13 {
      %c0 = arith.constant 0 : index
      %c0_4 = arith.constant 0 : index
      %14 = vector.load %arg6[%c0, %c0_4] : memref<8x1xi32, #tpu.memory_space<vmem>>, vector<8x1xi32>
      %c0_5 = arith.constant 0 : index
      %c0_6 = arith.constant 0 : index
      %15 = vector.load %arg5[%c0_5, %c0_6] : memref<8x1xi32, #tpu.memory_space<vmem>>, vector<8x1xi32>
      %16 = arith.subi %14, %15 : vector<8x1xi32>
      %17 = arith.sitofp %16 : vector<8x1xi32> to vector<8x1xf32>
      %18 = tpu.reciprocal %17 : vector<8x1xf32> -> vector<8x1xf32>
      %c0_7 = arith.constant 0 : index
      %c0_8 = arith.constant 0 : index
      %19 = vector.load %arg8[%c0_7, %c0_8] : memref<8x128xf32, #tpu.memory_space<vmem>>, vector<8x128xf32>
      %20 = vector.broadcast %18 : vector<8x1xf32> to vector<8x128xf32>
      %21 = arith.mulf %19, %20 : vector<8x128xf32>
      %c0_9 = arith.constant 0 : index
      %c0_10 = arith.constant 0 : index
      %22 = vector.load %arg8[%c0_9, %c0_10] : memref<8x128xf32, #tpu.memory_space<vmem>>, vector<8x128xf32>
      tpu.vector_store %arg8[%c0_9, %c0_10], %21 {strides = array<i32>} : memref<8x128xf32, #tpu.memory_space<vmem>>, vector<8x128xf32>,
    } else {
    }
    return
  }
  func.func @transform_0(%arg0: i32, %arg1: i32, %arg2: i32, %arg3: memref<1xi32, #tpu.memory_space<smem>>, %arg4: memref<1xi32, #tpu.memory_space<smem>>) -> (i32, i32) {
    %c0_i32 = arith.constant 0 : i32
    %c0_i32_0 = arith.constant 0 : i32
    return %arg0, %c0_i32 : i32, i32
  }
  func.func @transform_1(%arg0: i32, %arg1: i32, %arg2: i32, %arg3: memref<1xi32, #tpu.memory_space<smem>>, %arg4: memref<1xi32, #tpu.memory_space<smem>>) -> (i32, i32) {
    %c0_i32 = arith.constant 0 : i32
    %c0_i32_0 = arith.constant 0 : i32
    return %arg0, %c0_i32 : i32, i32
  }
  func.func @transform_2(%arg0: i32, %arg1: i32, %arg2: i32, %arg3: memref<1xi32, #tpu.memory_space<smem>>, %arg4: memref<1xi32, #tpu.memory_space<smem>>) -> (i32, i32) {
    %0 = arith.index_cast %arg0 : i32 to index
    %1 = memref.load %arg3[%0] : memref<1xi32, #tpu.memory_space<smem>>
    %2 = arith.addi %1, %arg2 : i32
    %3 = arith.index_cast %arg0 : i32 to index
    %4 = memref.load %arg4[%3] : memref<1xi32, #tpu.memory_space<smem>>
    %5 = arith.minsi %2, %4 : i32
    %c0_i32 = arith.constant 0 : i32
    return %5, %arg1 : i32, i32
  }
  func.func @transform_3(%arg0: i32, %arg1: i32, %arg2: i32, %arg3: memref<1xi32, #tpu.memory_space<smem>>, %arg4: memref<1xi32, #tpu.memory_space<smem>>) -> (i32, i32) {
    %c0_i32 = arith.constant 0 : i32
    return %arg0, %arg1 : i32, i32
  }
}

</mosaic_0001>

<llo_original>
// kernel: tpu_custom_call.1
$region0: #{tpu_custom_call.1}
  #allocation0 [shape = 'u32[]', space=smem, size = 0x4, offset = 0x4, fixed_abs, tag = 'smem constant byte address 0x4 - core index']
  #allocation1 [shape = 'u32[72,128]{1,0:T(1,128)}', space=vmem, size = 0x9000, scoped, tag = 'internal scratch']
  #allocation2 [shape = 's32[1]{0}', space=sflag, size = 0x4, scoped, tag = 'scoped memory for tpu_custom_call.1']
  #allocation3 [shape = 's32[1]{0:T(128)S(6)}', space=smem, size = 0x200, scoped, tag = 'prefetched SMEM operand 0']
  #allocation4 [shape = 's32[1]{0:T(128)S(6)}', space=smem, size = 0x200, scoped, tag = 'prefetched SMEM operand 1']
  %s0 = inlined_call_operand.<no memory space> [shape: s32[1], index: 0, kind: input, shape index: {}]
  %s1 = inlined_call_operand.<no memory space> [shape: s32[1], index: 1, kind: input, shape index: {}]
  %s2 = inlined_call_operand.vmem [shape: s32[8,1], index: 2, kind: input, shape index: {}]
  %s3 = inlined_call_operand.vmem [shape: s32[8,1], index: 3, kind: input, shape index: {}]
  %s4 = inlined_call_operand.vmem [shape: f32[16,128], index: 4, kind: input, shape index: {}]
  %s5 = inlined_call_operand.hbm [shape: f32[8,128], index: 5, kind: output, shape index: {}]
  %s6 = sld [smem:[#allocation0]]
  $region34: #{tpu_custom_call.1} parent=0
    _
  %s8 = ssub.s32 1, %s6
  %s9 = scalar_select 0, %s8, %s6
  %10 = sst [smem:[#allocation3]] %s0
  %11 = sst [smem:[#allocation4]] %s1
  $region1: #{tpu_custom_call.1} parent=0
    #allocation5 [shape = 'u8[4096]{0}', space=vmem, size = 0x1000, scoped, tag = 'output window, operand 0, single buffered']
    #allocation6 [shape = 's32[1]{0}', space=sflag, size = 0x4, scoped, tag = 'scoped memory for tpu_custom_call.1']
    %12 = vsyncpa [#allocation6], 0
    // Predicated region
    $region2: #{tpu_custom_call.1} parent=1 // pred_check
      _
    $region3: #{tpu_custom_call.1} parent=1 // pred_check_branch
      %14 = sbr.rel (0) target = $region5
    $region4: #{tpu_custom_call.1} parent=1 // pred_region
      _
    $region5: #{tpu_custom_call.1} parent=1 // pred_fallthru
      _
    // Predicated region
    $region6: #{tpu_custom_call.1} parent=1 // pred_check
      _
    $region7: #{tpu_custom_call.1} parent=1 // pred_check_branch
      %16 = sbr.rel (0) target = $region9
    $region8: #{tpu_custom_call.1} parent=1 // pred_region
      _
    $region9: #{tpu_custom_call.1} parent=1 // pred_fallthru
      _
    // Predicated region
    $region10: #{tpu_custom_call.1} parent=1 // pred_check
      _
    $region11: #{tpu_custom_call.1} parent=1 // pred_check_branch
      %18 = sbr.rel (0) target = $region13
    $region12: #{tpu_custom_call.1} parent=1 // pred_region
      %s19 = sld [smem:[#allocation3]]
      %s20 = sadd.s32 %s19, 0
      %s21 = sld [smem:[#allocation4]]
      %p22 = scmp.lt.s32.totalorder %s20, %s21
      %s23 = scalar_select %p22, %s20, %s21
      %s24 = smul.u32 2, %s23
      %p25 = scmp.lt.s32.totalorder %s24, 1
      %s26 = scalar_select %p25, %s24, 1
      %s27 = smul.addr %s26, 8
      %s28 = scalar_lea.vmem %s4, %s27
      %s29 = sld [smem:[#allocation3]]
      %s30 = sadd.s32 %s29, 0
      %s31 = sld [smem:[#allocation4]]
      %p32 = scmp.lt.s32.totalorder %s30, %s31
      %s33 = scalar_select %p32, %s30, %s31
      %s34 = smul.u32 2, %s33
    $region13: #{tpu_custom_call.1} parent=1 // pred_fallthru
      _
    %s35 = sld [smem:[#allocation3]]
    %s36 = sadd.s32 %s35, 0
    %s37 = sld [smem:[#allocation4]]
    %p38 = scmp.lt.s32.totalorder %s36, %s37
    %s39 = scalar_select %p38, %s36, %s37
    %s40 = smul.u32 2, %s39
    %p41 = scmp.lt.s32.totalorder %s40, 1
    %s42 = scalar_select %p41, %s40, 1
    %s43 = smul.addr %s42, 8
    %s44 = scalar_lea.vmem %s4, %s43
    %s45 = sld [smem:[#allocation3]]
    %s46 = sadd.s32 %s45, 0
    %s47 = sld [smem:[#allocation4]]
    %p48 = scmp.lt.s32.totalorder %s46, %s47
    %s49 = scalar_select %p48, %s46, %s47
    %s50 = smul.u32 2, %s49
    %p51 = scmp.lt.s32.totalorder %s50, 1
    %s52 = scalar_select %p51, %s50, 1
    %s53 = smul.addr %s52, 8
    %s54 = scalar_lea.vmem %s4, %s53
    %s55 = sld [smem:[#allocation3]]
    %s56 = sadd.s32 %s55, 0
    %s57 = sld [smem:[#allocation4]]
    %p58 = scmp.lt.s32.totalorder %s56, %s57
    %s59 = scalar_select %p58, %s56, %s57
    %s60 = smul.u32 2, %s59
    %p61 = scmp.eq.s32.totalorder 0, 0
    // Predicated region
    $region14: #{tpu_custom_call.1} parent=1 // pred_check
      %p62 = pneg %p61
    $region15: #{tpu_custom_call.1} parent=1 // pred_check_branch
      %64 = sbr.rel (%p62) target = $region17
    $region16: #{tpu_custom_call.1} parent=1 // pred_region
      %65 = vst [vmem:[#allocation5] sm:$0xff] 0.0
    $region17: #{tpu_custom_call.1} parent=1 // pred_fallthru
      _
    %s66 = sld [smem:[#allocation3]]
    %s67 = sld [smem:[#allocation4]]
    %s68 = sadd.s32 %s66, 0
    %p69 = scmp.le.s32.totalorder %s68, %s67
    // Predicated region
    $region18: #{tpu_custom_call.1} parent=1 // pred_check
      %p70 = pneg %p69
    $region19: #{tpu_custom_call.1} parent=1 // pred_check_branch
      %72 = sbr.rel (%p70) target = $region21
    $region20: #{tpu_custom_call.1} parent=1 // pred_region
      %s73 = smul.u32 %s68, 16
      %v74 = vlaneseq
      %v75 = vand.u32 %v74, 127
      %v76 = vstv %s73
      %v77 = vadd.s32 %v76, %v75
      %v78 = vld [vmem:[%s2] sm:$0xff]
      %v79 = vld [vmem:[%s3] sm:$0xff]
      %80 = vset.pattern.permute.xlu0 0
      %81 = vperm.xlu0 %80, %v78
      %v82 = vpop.permute.xlu0 %81
      %vm83 = vcmp.ge.s32.totalorder %v77, %v82
      %84 = vset.pattern.permute.xlu0 0
      %85 = vperm.xlu0 %84, %v79
      %v86 = vpop.permute.xlu0 %85
      %vm87 = vcmp.lt.s32.totalorder %v77, %v86
      %vm88 = vmand %vm83, %vm87
      %v89 = vsel %vm88, 1, 0
      %v90 = vcvt.s32.f32 %v89
      %v91 = vld [vmem:[#allocation5] sm:$0xff]
      %v92 = vld [vmem:[%s54] sm:$0xff]
      %v93 = vld [vmem:[%s54 + $0x8] sm:$0xff]
      %vm94 = vcmask 130048
      %v96 = vsel %vm94, %v90, 0
      %98 = vmatpush.msra.mxu0 0.0
      %99 = vmatpush.msra.mxu0 0.0
      %100 = vmatpush.msra.mxu0 0.0
      %101 = vmatpush.msra.mxu0 0.0
      %102 = vmatpush.msra.mxu0 0.0
      %103 = vmatpush.msra.mxu0 0.0
      %104 = vmatpush.msra.mxu0 0.0
      %105 = vmatpush.msra.mxu0 0.0
      %106 = vmatpush.msra.mxu0 0.0
      %107 = vmatpush.msra.mxu0 0.0
      %108 = vmatpush.msra.mxu0 0.0
      %109 = vmatpush.msra.mxu0 0.0
      %110 = vmatpush.msra.mxu0 0.0
      %111 = vmatpush.msra.mxu0 0.0
      %112 = vmatpush.msra.mxu0 %v93
      %113 = vmatpush.msra.mxu0 %v92
      %114 = vmatmul.f32.gmra.mxu0 %v96
      %v115 = vpop.f32.mrf.mxu0
      %v116 = vadd.f32 0.0, %v115
      %117 = vdwg.mxu0
      %v118 = vadd.f32 %v91, %v116
      %119 = vst [vmem:[#allocation5] sm:$0xff] %v118
    $region21: #{tpu_custom_call.1} parent=1 // pred_fallthru
      _
    // Predicated region
    $region22: #{tpu_custom_call.1} parent=1 // pred_check
      %p120 = pneg %p61
    $region23: #{tpu_custom_call.1} parent=1 // pred_check_branch
      %122 = sbr.rel (%p120) target = $region25
    $region24: #{tpu_custom_call.1} parent=1 // pred_region
      %v123 = vld [vmem:[%s3] sm:$0xff]
      %v124 = vld [vmem:[%s2] sm:$0xff]
      %v125 = vsub.s32 %v123, %v124
      %v126 = vcvt.s32.f32 %v125
      %v127 = vrcp.pop %v126
      %v128 = vmul.f32 %v126, %v127
      %v129 = vsub.f32 1.0, %v128
      %v130 = vmul.f32 %v127, %v129
      %v131 = vadd.f32 %v127, %v130
      %vm132 = vweird.f32 %v126
      %vm133 = vweird.f32 %v127
      %vm134 = vmor %vm132, %vm133
      %v135 = vsel %vm134, %v127, %v131
      %v136 = vand.u32 2147483647, %v126
      %vm137 = vcmp.eq.f32.partialorder %v136, 8.507059e+37
      %v138 = vand.u32 %v126, 2147483648
      %v139 = vor.u32 1.1754944e-38, %v138
      %v140 = vsel %vm137, %v139, %v135
      %v141 = vld [vmem:[#allocation5] sm:$0xff]
      %143 = vset.pattern.permute.xlu0 0
      %144 = vperm.xlu0 %143, %v140
      %v145 = vpop.permute.xlu0 %144
      %v147 = vmul.f32 %v141, %v145
      %148 = vst [vmem:[#allocation5] sm:$0xff] %v147
    $region25: #{tpu_custom_call.1} parent=1 // pred_fallthru
      _
    // Predicated region
    $region26: #{tpu_custom_call.1} parent=1 // pred_check
      _
    $region27: #{tpu_custom_call.1} parent=1 // pred_check_branch
      %150 = sbr.rel (0) target = $region29
    $region28: #{tpu_custom_call.1} parent=1 // pred_region
      %152 = vsyncadd [#allocation6], 0
      %s154 = sshll.u32 [#allocation5], 4
      %s155 = int_to_ptr.vmem [resolvable:$true] %s154
      %s156 = sshll.u32 %s5, 4
      %s157 = int_to_ptr.hbm [resolvable:$true] %s156
      %159 = dma.vmem_to_hbm [thread:$0]  %s155, 128, %s157, [#allocation6]
    $region29: #{tpu_custom_call.1} parent=1 // pred_fallthru
      _
    // Predicated region
    $region30: #{tpu_custom_call.1} parent=1 // pred_check
      _
    $region31: #{tpu_custom_call.1} parent=1 // pred_check_branch
      %161 = sbr.rel (0) target = $region33
    $region32: #{tpu_custom_call.1} parent=1 // pred_region
      %163 = dma.done [#allocation6], 128
    $region33: #{tpu_custom_call.1} parent=1 // pred_fallthru
      _
    %164 = vsyncpa [#allocation6], 1

</llo_original>
